<compile_context>
chip_gen: v7x
topology: tpu7x:2x2x1
jax: 0.10.0
libtpu: 0.0.40
codegen_flags: <defaults>
</compile_context>

<pallas_src>
import functools

import jax
import jax.numpy as jnp
from jax.experimental import pallas as pl
from jax.experimental.pallas import tpu as pltpu

N_NODES = 16           # matches the PyTorch module
H1 = 4 * N_NODES       # 64
H2 = 2 * N_NODES       # 32
OUT_LANES = 128        # lane-dense padded output width
SUBLANE = 8            # f32 sublane packing
MAX_TB = 512           # max batch-tile rows (multiple of 8)


def _round_up(n, m):
    return ((n + m - 1) // m) * m


def _dqn_kernel(x_ref, w1_ref, b1_ref, w2_ref, b2_ref, w3_ref, b3_ref, o_ref):
    # layer1 + ReLU (f32 accumulation; bias/ReLU in f32 — v5e has no bf16 VPU)
    h = jnp.dot(x_ref[...], w1_ref[...], preferred_element_type=jnp.float32)
    h = jnp.maximum(h + b1_ref[...], 0.0)
    # layer3 + ReLU
    h = jnp.dot(h.astype(w2_ref.dtype), w2_ref[...],
                preferred_element_type=jnp.float32)
    h = jnp.maximum(h + b2_ref[...], 0.0)
    # layer4 (no activation). Output tile is lane-dense (128 cols); the real
    # n_actions columns are sliced out by the wrapper.
    o = jnp.dot(h.astype(w3_ref.dtype), w3_ref[...],
                preferred_element_type=jnp.float32)
    o_ref[...] = o + b3_ref[...]


def prepare_params(params, matmul_dtype=jnp.float32):
    """One-time conversion from PyTorch layout to kernel layout.

    PyTorch nn.Linear stores W as (out, in) and computes x @ W.T + b. Here we
    transpose once to (in, out), pad the last layer to OUT_LANES columns for
    unmasked (lane-dense) stores, and reshape biases to (1, N). Call this at
    parameter-load time, NOT per forward call.  On v6e/v7x pass
    matmul_dtype=jnp.bfloat16 for MXU-native operands.
    """
    n_actions = params["w3"].shape[0]
    w3 = params["w3"].T                                        # (H2, n_actions)
    w3 = jnp.pad(w3, ((0, 0), (0, OUT_LANES - n_actions)))     # (H2, 128)
    b3 = jnp.pad(params["b3"], (0, OUT_LANES - n_actions))     # (128,)
    return {
        "w1": params["w1"].T.astype(matmul_dtype),             # (n_in, H1)
        "b1": params["b1"].reshape(1, -1).astype(jnp.float32),
        "w2": params["w2"].T.astype(matmul_dtype),             # (H1, H2)
        "b2": params["b2"].reshape(1, -1).astype(jnp.float32),
        "w3": w3.astype(matmul_dtype),                         # (H2, 128)
        "b3": b3.reshape(1, -1).astype(jnp.float32),           # (1, 128)
    }


def _vmem_budget(tb, n_in):
    """Explicit scoped-VMEM budget from padded tile shapes (documents the
    budget; keeps large-B callers from silently overrunning the default)."""
    lane = 128
    x_tile = tb * _round_up(n_in, lane) * 4
    o_tile = tb * OUT_LANES * 4
    w_bytes = (_round_up(n_in, SUBLANE) * lane     # w1 (lane-padded)
               + H1 * lane + H2 * lane + 3 * lane) * 4
    act = 2 * tb * lane * 4                        # in-kernel h1/h2 temporaries
    total = 2 * (x_tile + o_tile) + 2 * w_bytes + act
    return int(min(2 * total + (1 << 20), 64 << 20))


@functools.partial(jax.jit, static_argnames=("n_actions",))
def deep_q_forward(x, kparams, *, n_actions):
    """x: (B, n_inputs). kparams: output of prepare_params()."""
    B, n_in = x.shape
    # Batch tile: multiple of 8 (f32 sublane), capped at MAX_TB. Pad B up to a
    # multiple of TB so every tile is full (tail rows are discarded afterwards).
    tb = min(MAX_TB, _round_up(max(B, 1), SUBLANE))
    bp = _round_up(B, tb)
    x = x.astype(kparams["w1"].dtype)
    if bp != B:
        x = jnp.pad(x, ((0, bp - B), (0, 0)))
    grid = (bp // tb,)

    w1, b1 = kparams["w1"], kparams["b1"]
    w2, b2 = kparams["w2"], kparams["b2"]
    w3, b3 = kparams["w3"], kparams["b3"]

    def pinned(shape):
        # Same block every grid step -> stays resident in VMEM, no re-DMA.
        return pl.BlockSpec(shape, lambda i: (0, 0))

    out = pl.pallas_call(
        _dqn_kernel,
        out_shape=jax.ShapeDtypeStruct((bp, OUT_LANES), jnp.float32),
        grid=grid,
        in_specs=[
            pl.BlockSpec((tb, n_in), lambda i: (i, 0)),   # x: batch-tiled
            pinned(w1.shape), pinned(b1.shape),
            pinned(w2.shape), pinned(b2.shape),
            pinned(w3.shape), pinned(b3.shape),
        ],
        out_specs=pl.BlockSpec((tb, OUT_LANES), lambda i: (i, 0)),
        compiler_params=pltpu.CompilerParams(
            dimension_semantics=("parallel",),   # uses both TCs on v7x
            vmem_limit_bytes=_vmem_budget(tb, n_in),
        ),
    )(x, w1, b1, w2, b2, w3, b3)
    return out[:B, :n_actions]


def init_params(key, n_inputs, n_actions):
    """Deterministic synthetic init matching nn.Linear shapes (out, in)."""
    dims = [
        ("w1", (H1, n_inputs)), ("b1", (H1,)),
        ("w2", (H2, H1)), ("b2", (H2,)),
        ("w3", (n_actions, H2)), ("b3", (n_actions,)),
    ]
    params = {}
    for name, shape in dims:
        key, sub = jax.random.split(key)
        fan_in = shape[-1] if len(shape) > 1 else shape[0]
        bound = 1.0 / jnp.sqrt(float(fan_in))
        params[name] = jax.random.uniform(
            sub, shape, jnp.float32, minval=-bound, maxval=bound)
    return params


def reference_forward(x, params):
    h = jnp.maximum(x @ params["w1"].T + params["b1"], 0.0)
    h = jnp.maximum(h @ params["w2"].T + params["b2"], 0.0)
    return h @ params["w3"].T + params["b3"]


if __name__ == "__main__":
    n_inputs, n_actions = 8, 4
    key = jax.random.PRNGKey(0)
    key, kx1, kx2 = jax.random.split(key, 3)
    params = init_params(key, n_inputs, n_actions)
    kparams = prepare_params(params)   # one-time: transpose / pad / reshape

    # Small check (batch=2): single grid point, padded up to one 8-row tile.
    x_small = jax.random.normal(kx1, (2, n_inputs), jnp.float32)
    out_small = jax.block_until_ready(
        deep_q_forward(x_small, kparams, n_actions=n_actions))
    ref_small = reference_forward(x_small, params)
    assert out_small.shape == (2, n_actions)
    assert jnp.allclose(out_small, ref_small, atol=1e-5, rtol=1e-5)

    # Larger check: exercises multi-tile grid + ragged-tail padding.
    x_big = jax.random.normal(kx2, (600, n_inputs), jnp.float32)
    out_big = jax.block_until_ready(
        deep_q_forward(x_big, kparams, n_actions=n_actions))
    ref_big = reference_forward(x_big, params)
    assert out_big.shape == (600, n_actions)
    assert jnp.allclose(out_big, ref_big, atol=1e-4, rtol=1e-4)

    print("KERNEL_OK")
</pallas_src>

<mosaic_0001>
module attributes {stable_mosaic.version = 11 : i64} {
  func.func @_dqn_kernel(%arg0: i32, %arg1: memref<8x8xf32, #tpu.memory_space<vmem>>, %arg2: memref<8x64xf32, #tpu.memory_space<vmem>>, %arg3: memref<1x64xf32, #tpu.memory_space<vmem>>, %arg4: memref<64x32xf32, #tpu.memory_space<vmem>>, %arg5: memref<1x32xf32, #tpu.memory_space<vmem>>, %arg6: memref<32x128xf32, #tpu.memory_space<vmem>>, %arg7: memref<1x128xf32, #tpu.memory_space<vmem>>, %arg8: memref<8x128xf32, #tpu.memory_space<vmem>>) attributes {dimension_semantics = [#tpu.dimension_semantics<parallel>], iteration_bounds = array<i64: 1>, scalar_prefetch = 0 : i64, scratch_operands = 0 : i64, tpu.core_type = #tpu.core_type<tc>, window_params = [{transform_indices = @transform_0, window_bounds = array<i64: 8, 8>}, {pipeline_mode = #tpu.pipeline_mode<synchronous>, transform_indices = @transform_1, window_bounds = array<i64: 8, 64>}, {pipeline_mode = #tpu.pipeline_mode<synchronous>, transform_indices = @transform_2, window_bounds = array<i64: 1, 64>}, {pipeline_mode = #tpu.pipeline_mode<synchronous>, transform_indices = @transform_3, window_bounds = array<i64: 64, 32>}, {pipeline_mode = #tpu.pipeline_mode<synchronous>, transform_indices = @transform_4, window_bounds = array<i64: 1, 32>}, {pipeline_mode = #tpu.pipeline_mode<synchronous>, transform_indices = @transform_5, window_bounds = array<i64: 32, 128>}, {pipeline_mode = #tpu.pipeline_mode<synchronous>, transform_indices = @transform_6, window_bounds = array<i64: 1, 128>}, {transform_indices = @transform_7, window_bounds = array<i64: 8, 128>}]} {
    %c0 = arith.constant 0 : index
    %c0_0 = arith.constant 0 : index
    %0 = vector.load %arg1[%c0, %c0_0] : memref<8x8xf32, #tpu.memory_space<vmem>>, vector<8x8xf32>
    %c0_1 = arith.constant 0 : index
    %c0_2 = arith.constant 0 : index
    %1 = vector.load %arg2[%c0_1, %c0_2] : memref<8x64xf32, #tpu.memory_space<vmem>>, vector<8x64xf32>
    %cst = arith.constant dense<0.000000e+00> : vector<8x64xf32>
    %2 = tpu.matmul %0, %1, %cst {dimension_numbers = #tpu.dot_dimension_numbers<[1], [0], [0], [1], [0, 0, 1, 1], [], []>} : vector<8x8xf32>, vector<8x64xf32>, vector<8x64xf32> -> vector<8x64xf32>
    %c0_3 = arith.constant 0 : index
    %c0_4 = arith.constant 0 : index
    %3 = vector.load %arg3[%c0_3, %c0_4] : memref<1x64xf32, #tpu.memory_space<vmem>>, vector<1x64xf32>
    %4 = vector.broadcast %3 : vector<1x64xf32> to vector<8x64xf32>
    %5 = arith.addf %2, %4 : vector<8x64xf32>
    %cst_5 = arith.constant 0.000000e+00 : f32
    %6 = vector.broadcast %cst_5 : f32 to vector<8x64xf32>
    %7 = arith.maximumf %5, %6 : vector<8x64xf32>
    %c0_6 = arith.constant 0 : index
    %c0_7 = arith.constant 0 : index
    %8 = vector.load %arg4[%c0_6, %c0_7] : memref<64x32xf32, #tpu.memory_space<vmem>>, vector<64x32xf32>
    %cst_8 = arith.constant dense<0.000000e+00> : vector<8x32xf32>
    %9 = tpu.matmul %7, %8, %cst_8 {dimension_numbers = #tpu.dot_dimension_numbers<[1], [0], [0], [1], [0, 0, 1, 1], [], []>} : vector<8x64xf32>, vector<64x32xf32>, vector<8x32xf32> -> vector<8x32xf32>
    %c0_9 = arith.constant 0 : index
    %c0_10 = arith.constant 0 : index
    %10 = vector.load %arg5[%c0_9, %c0_10] : memref<1x32xf32, #tpu.memory_space<vmem>>, vector<1x32xf32>
    %11 = vector.broadcast %10 : vector<1x32xf32> to vector<8x32xf32>
    %12 = arith.addf %9, %11 : vector<8x32xf32>
    %cst_11 = arith.constant 0.000000e+00 : f32
    %13 = vector.broadcast %cst_11 : f32 to vector<8x32xf32>
    %14 = arith.maximumf %12, %13 : vector<8x32xf32>
    %c0_12 = arith.constant 0 : index
    %c0_13 = arith.constant 0 : index
    %15 = vector.load %arg6[%c0_12, %c0_13] : memref<32x128xf32, #tpu.memory_space<vmem>>, vector<32x128xf32>
    %cst_14 = arith.constant dense<0.000000e+00> : vector<8x128xf32>
    %16 = tpu.matmul %14, %15, %cst_14 {dimension_numbers = #tpu.dot_dimension_numbers<[1], [0], [0], [1], [0, 0, 1, 1], [], []>} : vector<8x32xf32>, vector<32x128xf32>, vector<8x128xf32> -> vector<8x128xf32>
    %c0_15 = arith.constant 0 : index
    %c0_16 = arith.constant 0 : index
    %17 = vector.load %arg7[%c0_15, %c0_16] : memref<1x128xf32, #tpu.memory_space<vmem>>, vector<1x128xf32>
    %18 = vector.broadcast %17 : vector<1x128xf32> to vector<8x128xf32>
    %19 = arith.addf %16, %18 : vector<8x128xf32>
    %c0_17 = arith.constant 0 : index
    %c0_18 = arith.constant 0 : index
    %20 = vector.load %arg8[%c0_17, %c0_18] : memref<8x128xf32, #tpu.memory_space<vmem>>, vector<8x128xf32>
    tpu.vector_store %arg8[%c0_17, %c0_18], %19 {strides = array<i32>} : memref<8x128xf32, #tpu.memory_space<vmem>>, vector<8x128xf32>,
    return
  }
  func.func @transform_0(%arg0: i32) -> (i32, i32) {
    %c0_i32 = arith.constant 0 : i32
    %c0_i32_0 = arith.constant 0 : i32
    return %arg0, %c0_i32 : i32, i32
  }
  func.func @transform_1(%arg0: i32) -> (i32, i32) {
    %c0_i32 = arith.constant 0 : i32
    %c0_i32_0 = arith.constant 0 : i32
    %c0_i32_1 = arith.constant 0 : i32
    return %c0_i32, %c0_i32_0 : i32, i32
  }
  func.func @transform_2(%arg0: i32) -> (i32, i32) {
    %c0_i32 = arith.constant 0 : i32
    %c0_i32_0 = arith.constant 0 : i32
    %c0_i32_1 = arith.constant 0 : i32
    return %c0_i32, %c0_i32_0 : i32, i32
  }
  func.func @transform_3(%arg0: i32) -> (i32, i32) {
    %c0_i32 = arith.constant 0 : i32
    %c0_i32_0 = arith.constant 0 : i32
    %c0_i32_1 = arith.constant 0 : i32
    return %c0_i32, %c0_i32_0 : i32, i32
  }
  func.func @transform_4(%arg0: i32) -> (i32, i32) {
    %c0_i32 = arith.constant 0 : i32
    %c0_i32_0 = arith.constant 0 : i32
    %c0_i32_1 = arith.constant 0 : i32
    return %c0_i32, %c0_i32_0 : i32, i32
  }
  func.func @transform_5(%arg0: i32) -> (i32, i32) {
    %c0_i32 = arith.constant 0 : i32
    %c0_i32_0 = arith.constant 0 : i32
    %c0_i32_1 = arith.constant 0 : i32
    return %c0_i32, %c0_i32_0 : i32, i32
  }
  func.func @transform_6(%arg0: i32) -> (i32, i32) {
    %c0_i32 = arith.constant 0 : i32
    %c0_i32_0 = arith.constant 0 : i32
    %c0_i32_1 = arith.constant 0 : i32
    return %c0_i32, %c0_i32_0 : i32, i32
  }
  func.func @transform_7(%arg0: i32) -> (i32, i32) {
    %c0_i32 = arith.constant 0 : i32
    %c0_i32_0 = arith.constant 0 : i32
    return %arg0, %c0_i32 : i32, i32
  }
}

</mosaic_0001>

<llo_original>
// kernel: deep_q_forward.1
$region0: #{deep_q_forward.1}
  #allocation0 [shape = 'u32[]', space=smem, size = 0x4, offset = 0x4, fixed_abs, tag = 'smem constant byte address 0x4 - core index']
  #allocation1 [shape = 'u32[144,128]{1,0:T(1,128)}', space=vmem, size = 0x12000, scoped, tag = 'internal scratch']
  %s0 = inlined_call_operand.vmem [shape: f32[8,8], index: 0, kind: input, shape index: {}]
  %s1 = inlined_call_operand.vmem [shape: f32[8,64], index: 1, kind: input, shape index: {}]
  %s2 = inlined_call_operand.vmem [shape: f32[1,64], index: 2, kind: input, shape index: {}]
  %s3 = inlined_call_operand.vmem [shape: f32[64,32], index: 3, kind: input, shape index: {}]
  %s4 = inlined_call_operand.vmem [shape: f32[1,32], index: 4, kind: input, shape index: {}]
  %s5 = inlined_call_operand.vmem [shape: f32[32,128], index: 5, kind: input, shape index: {}]
  %s6 = inlined_call_operand.vmem [shape: f32[1,128], index: 6, kind: input, shape index: {}]
  %s7 = inlined_call_operand.vmem [shape: f32[8,128], index: 7, kind: output, shape index: {}]
  %s8 = sld [smem:[#allocation0]]
  $region38: #{deep_q_forward.1} parent=0
    _
  %s10 = ssub.s32 1, %s8
  %s11 = scalar_select 0, %s10, %s8
  // Predicated region
  $region2: #{deep_q_forward.1} parent=0 // pred_check
    _
  $region3: #{deep_q_forward.1} parent=0 // pred_check_branch
    %13 = sbr.rel (0) target = $region5
  $region4: #{deep_q_forward.1} parent=0 // pred_region
    _
  $region5: #{deep_q_forward.1} parent=0 // pred_fallthru
    _
  // Predicated region
  $region6: #{deep_q_forward.1} parent=0 // pred_check
    _
  $region7: #{deep_q_forward.1} parent=0 // pred_check_branch
    %15 = sbr.rel (0) target = $region9
  $region8: #{deep_q_forward.1} parent=0 // pred_region
    _
  $region9: #{deep_q_forward.1} parent=0 // pred_fallthru
    _
  // Predicated region
  $region10: #{deep_q_forward.1} parent=0 // pred_check
    _
  $region11: #{deep_q_forward.1} parent=0 // pred_check_branch
    %17 = sbr.rel (0) target = $region13
  $region12: #{deep_q_forward.1} parent=0 // pred_region
    _
  $region13: #{deep_q_forward.1} parent=0 // pred_fallthru
    _
  // Predicated region
  $region14: #{deep_q_forward.1} parent=0 // pred_check
    _
  $region15: #{deep_q_forward.1} parent=0 // pred_check_branch
    %19 = sbr.rel (0) target = $region17
  $region16: #{deep_q_forward.1} parent=0 // pred_region
    _
  $region17: #{deep_q_forward.1} parent=0 // pred_fallthru
    _
  // Predicated region
  $region18: #{deep_q_forward.1} parent=0 // pred_check
    _
  $region19: #{deep_q_forward.1} parent=0 // pred_check_branch
    %21 = sbr.rel (0) target = $region21
  $region20: #{deep_q_forward.1} parent=0 // pred_region
    _
  $region21: #{deep_q_forward.1} parent=0 // pred_fallthru
    _
  // Predicated region
  $region22: #{deep_q_forward.1} parent=0 // pred_check
    _
  $region23: #{deep_q_forward.1} parent=0 // pred_check_branch
    %23 = sbr.rel (0) target = $region25
  $region24: #{deep_q_forward.1} parent=0 // pred_region
    _
  $region25: #{deep_q_forward.1} parent=0 // pred_fallthru
    _
  // Predicated region
  $region26: #{deep_q_forward.1} parent=0 // pred_check
    _
  $region27: #{deep_q_forward.1} parent=0 // pred_check_branch
    %25 = sbr.rel (0) target = $region29
  $region28: #{deep_q_forward.1} parent=0 // pred_region
    _
  $region29: #{deep_q_forward.1} parent=0 // pred_fallthru
    _
  %v26 = vld [vmem:[%s0] sm:$0xff]
  %v27 = vld [vmem:[%s1] sm:$0xff]
  %v28 = vld [vmem:[%s2] sm:$0x1]
  %v30 = vlaneseq
  %v31 = vshrl.u32 %v30, 7
  %v32 = vsub.s32 0, %v31
  %v33 = vrot.slane %v28, %v32
  %vm35 = vcmask 64512
  %v37 = vsel %vm35, %v26, 0
  %39 = vmatprep.subr.mxu0 0.0
  %40 = vmatpush1.msra.mxu0 %v27
  %41 = vmatprep.subr.mxu0 0.0
  %42 = vmatpush1.msra.mxu0 0.0
  %43 = vmatprep.subr.mxu0 0.0
  %44 = vmatpush1.msra.mxu0 0.0
  %45 = vmatprep.subr.mxu0 0.0
  %46 = vmatpush1.msra.mxu0 0.0
  %47 = vmatprep.subr.mxu0 0.0
  %48 = vmatpush1.msra.mxu0 0.0
  %49 = vmatprep.subr.mxu0 0.0
  %50 = vmatpush1.msra.mxu0 0.0
  %51 = vmatprep.subr.mxu0 0.0
  %52 = vmatpush1.msra.mxu0 0.0
  %53 = vmatprep.subr.mxu0 0.0
  %54 = vmatpush1.msra.mxu0 0.0
  %55 = vmatprep.subr.mxu0 0.0
  %56 = vmatpush1.msra.mxu0 0.0
  %57 = vmatprep.subr.mxu0 0.0
  %58 = vmatpush1.msra.mxu0 0.0
  %59 = vmatprep.subr.mxu0 0.0
  %60 = vmatpush1.msra.mxu0 0.0
  %61 = vmatprep.subr.mxu0 0.0
  %62 = vmatpush1.msra.mxu0 0.0
  %63 = vmatprep.subr.mxu0 0.0
  %64 = vmatpush1.msra.mxu0 0.0
  %65 = vmatprep.subr.mxu0 0.0
  %66 = vmatpush1.msra.mxu0 0.0
  %67 = vmatprep.subr.mxu0 0.0
  %68 = vmatpush1.msra.mxu0 0.0
  %69 = vmatprep.subr.mxu0 0.0
  %70 = vmatpush1.msra.mxu0 0.0
  %71 = vmatprep.subr.mxu0 0.0
  %72 = vmatpush1.msra.mxu0 0.0
  %73 = vmatprep.subr.mxu0 0.0
  %74 = vmatpush1.msra.mxu0 0.0
  %75 = vmatprep.subr.mxu0 0.0
  %76 = vmatpush1.msra.mxu0 0.0
  %77 = vmatprep.subr.mxu0 0.0
  %78 = vmatpush1.msra.mxu0 0.0
  %79 = vmatprep.subr.mxu0 0.0
  %80 = vmatpush1.msra.mxu0 0.0
  %81 = vmatprep.subr.mxu0 0.0
  %82 = vmatpush1.msra.mxu0 0.0
  %83 = vmatprep.subr.mxu0 0.0
  %84 = vmatpush1.msra.mxu0 0.0
  %85 = vmatprep.subr.mxu0 0.0
  %86 = vmatpush1.msra.mxu0 0.0
  %87 = vmatprep.subr.mxu0 0.0
  %88 = vmatpush1.msra.mxu0 0.0
  %89 = vmatprep.subr.mxu0 0.0
  %90 = vmatpush1.msra.mxu0 0.0
  %91 = vmatprep.subr.mxu0 0.0
  %92 = vmatpush1.msra.mxu0 0.0
  %93 = vmatprep.subr.mxu0 0.0
  %94 = vmatpush1.msra.mxu0 0.0
  %95 = vmatprep.subr.mxu0 0.0
  %96 = vmatpush1.msra.mxu0 0.0
  %97 = vmatprep.subr.mxu0 0.0
  %98 = vmatpush1.msra.mxu0 0.0
  %99 = vmatprep.subr.mxu0 0.0
  %100 = vmatpush1.msra.mxu0 0.0
  %101 = vmatprep.subr.mxu0 0.0
  %102 = vmatpush1.msra.mxu0 0.0
  %103 = vmatprep.mubr.f32.mxu0 0.0
  %104 = vmatmul.mubr.f32.gmra.mrb[0].mxu0 %v37
  %v105 = vpop.f32.mrb[0].mxu0
  %v106 = vadd.f32 %v33, %v105
  %v107 = vpop.f32.mrb[0].mxu0
  %108 = vdwg.mxu0
  %v109 = vmax.f32 %v106, 0.0
  %v110 = vld [vmem:[%s3] sm:$0xff]
  %v111 = vld [vmem:[%s3 + $0x8] sm:$0xff]
  %v112 = vld [vmem:[%s3 + $0x10] sm:$0xff]
  %v113 = vld [vmem:[%s3 + $0x18] sm:$0xff]
  %v114 = vld [vmem:[%s3 + $0x20] sm:$0xff]
  %v115 = vld [vmem:[%s3 + $0x28] sm:$0xff]
  %v116 = vld [vmem:[%s3 + $0x30] sm:$0xff]
  %v117 = vld [vmem:[%s3 + $0x38] sm:$0xff]
  %v118 = vld [vmem:[%s4] sm:$0x1]
  %v120 = vlaneseq
  %v121 = vshrl.u32 %v120, 7
  %v122 = vsub.s32 0, %v121
  %v123 = vrot.slane %v118, %v122
  %vm125 = vcmask 523264
  %v127 = vsel %vm125, %v109, 0
  %129 = vmatprep.subr.mxu0 0.0
  %130 = vmatpush1.msra.mxu0 %v110
  %131 = vmatprep.subr.mxu0 0.0
  %132 = vmatpush1.msra.mxu0 %v111
  %133 = vmatprep.subr.mxu0 0.0
  %134 = vmatpush1.msra.mxu0 %v112
  %135 = vmatprep.subr.mxu0 0.0
  %136 = vmatpush1.msra.mxu0 %v113
  %137 = vmatprep.subr.mxu0 0.0
  %138 = vmatpush1.msra.mxu0 %v114
  %139 = vmatprep.subr.mxu0 0.0
  %140 = vmatpush1.msra.mxu0 %v115
  %141 = vmatprep.subr.mxu0 0.0
  %142 = vmatpush1.msra.mxu0 %v116
  %143 = vmatprep.subr.mxu0 0.0
  %144 = vmatpush1.msra.mxu0 %v117
  %145 = vmatprep.subr.mxu0 0.0
  %146 = vmatpush1.msra.mxu0 0.0
  %147 = vmatprep.subr.mxu0 0.0
  %148 = vmatpush1.msra.mxu0 0.0
  %149 = vmatprep.subr.mxu0 0.0
  %150 = vmatpush1.msra.mxu0 0.0
  %151 = vmatprep.subr.mxu0 0.0
  %152 = vmatpush1.msra.mxu0 0.0
  %153 = vmatprep.subr.mxu0 0.0
  %154 = vmatpush1.msra.mxu0 0.0
  %155 = vmatprep.subr.mxu0 0.0
  %156 = vmatpush1.msra.mxu0 0.0
  %157 = vmatprep.subr.mxu0 0.0
  %158 = vmatpush1.msra.mxu0 0.0
  %159 = vmatprep.subr.mxu0 0.0
  %160 = vmatpush1.msra.mxu0 0.0
  %161 = vmatprep.subr.mxu0 0.0
  %162 = vmatpush1.msra.mxu0 0.0
  %163 = vmatprep.subr.mxu0 0.0
  %164 = vmatpush1.msra.mxu0 0.0
  %165 = vmatprep.subr.mxu0 0.0
  %166 = vmatpush1.msra.mxu0 0.0
  %167 = vmatprep.subr.mxu0 0.0
  %168 = vmatpush1.msra.mxu0 0.0
  %169 = vmatprep.subr.mxu0 0.0
  %170 = vmatpush1.msra.mxu0 0.0
  %171 = vmatprep.subr.mxu0 0.0
  %172 = vmatpush1.msra.mxu0 0.0
  %173 = vmatprep.subr.mxu0 0.0
  %174 = vmatpush1.msra.mxu0 0.0
  %175 = vmatprep.subr.mxu0 0.0
  %176 = vmatpush1.msra.mxu0 0.0
  %177 = vmatprep.subr.mxu0 0.0
  %178 = vmatpush1.msra.mxu0 0.0
  %179 = vmatprep.subr.mxu0 0.0
  %180 = vmatpush1.msra.mxu0 0.0
  %181 = vmatprep.subr.mxu0 0.0
  %182 = vmatpush1.msra.mxu0 0.0
  %183 = vmatprep.subr.mxu0 0.0
  %184 = vmatpush1.msra.mxu0 0.0
  %185 = vmatprep.subr.mxu0 0.0
  %186 = vmatpush1.msra.mxu0 0.0
  %187 = vmatprep.subr.mxu0 0.0
  %188 = vmatpush1.msra.mxu0 0.0
  %189 = vmatprep.subr.mxu0 0.0
  %190 = vmatpush1.msra.mxu0 0.0
  %191 = vmatprep.subr.mxu0 0.0
  %192 = vmatpush1.msra.mxu0 0.0
  %193 = vmatprep.mubr.f32.mxu0 0.0
  %194 = vmatmul.mubr.f32.gmra.mrb[0].mxu0 %v127
  %v195 = vpop.f32.mrb[0].mxu0
  %v196 = vadd.f32 %v123, %v195
  %v197 = vpop.f32.mrb[0].mxu0
  %198 = vdwg.mxu0
  %v199 = vmax.f32 %v196, 0.0
  %v200 = vld [vmem:[%s5] sm:$0xff]
  %v201 = vld [vmem:[%s5 + $0x8] sm:$0xff]
  %v202 = vld [vmem:[%s5 + $0x10] sm:$0xff]
  %v203 = vld [vmem:[%s5 + $0x18] sm:$0xff]
  %v204 = vld [vmem:[%s6] sm:$0x1]
  %v206 = vlaneseq
  %v207 = vshrl.u32 %v206, 7
  %v208 = vsub.s32 0, %v207
  %v209 = vrot.slane %v204, %v208
  %vm211 = vcmask 261120
  %v213 = vsel %vm211, %v199, 0
  %215 = vmatprep.subr.mxu0 0.0
  %216 = vmatpush1.msra.mxu0 %v200
  %217 = vmatprep.subr.mxu0 0.0
  %218 = vmatpush1.msra.mxu0 %v201
  %219 = vmatprep.subr.mxu0 0.0
  %220 = vmatpush1.msra.mxu0 %v202
  %221 = vmatprep.subr.mxu0 0.0
  %222 = vmatpush1.msra.mxu0 %v203
  %223 = vmatprep.subr.mxu0 0.0
  %224 = vmatpush1.msra.mxu0 0.0
  %225 = vmatprep.subr.mxu0 0.0
  %226 = vmatpush1.msra.mxu0 0.0
  %227 = vmatprep.subr.mxu0 0.0
  %228 = vmatpush1.msra.mxu0 0.0
  %229 = vmatprep.subr.mxu0 0.0
  %230 = vmatpush1.msra.mxu0 0.0
  %231 = vmatprep.subr.mxu0 0.0
  %232 = vmatpush1.msra.mxu0 0.0
  %233 = vmatprep.subr.mxu0 0.0
  %234 = vmatpush1.msra.mxu0 0.0
  %235 = vmatprep.subr.mxu0 0.0
  %236 = vmatpush1.msra.mxu0 0.0
  %237 = vmatprep.subr.mxu0 0.0
  %238 = vmatpush1.msra.mxu0 0.0
  %239 = vmatprep.subr.mxu0 0.0
  %240 = vmatpush1.msra.mxu0 0.0
  %241 = vmatprep.subr.mxu0 0.0
  %242 = vmatpush1.msra.mxu0 0.0
  %243 = vmatprep.subr.mxu0 0.0
  %244 = vmatpush1.msra.mxu0 0.0
  %245 = vmatprep.subr.mxu0 0.0
  %246 = vmatpush1.msra.mxu0 0.0
  %247 = vmatprep.subr.mxu0 0.0
  %248 = vmatpush1.msra.mxu0 0.0
  %249 = vmatprep.subr.mxu0 0.0
  %250 = vmatpush1.msra.mxu0 0.0
  %251 = vmatprep.subr.mxu0 0.0
  %252 = vmatpush1.msra.mxu0 0.0
  %253 = vmatprep.subr.mxu0 0.0
  %254 = vmatpush1.msra.mxu0 0.0
  %255 = vmatprep.subr.mxu0 0.0
  %256 = vmatpush1.msra.mxu0 0.0
  %257 = vmatprep.subr.mxu0 0.0
  %258 = vmatpush1.msra.mxu0 0.0
  %259 = vmatprep.subr.mxu0 0.0
  %260 = vmatpush1.msra.mxu0 0.0
  %261 = vmatprep.subr.mxu0 0.0
  %262 = vmatpush1.msra.mxu0 0.0
  %263 = vmatprep.subr.mxu0 0.0
  %264 = vmatpush1.msra.mxu0 0.0
  %265 = vmatprep.subr.mxu0 0.0
  %266 = vmatpush1.msra.mxu0 0.0
  %267 = vmatprep.subr.mxu0 0.0
  %268 = vmatpush1.msra.mxu0 0.0
  %269 = vmatprep.subr.mxu0 0.0
  %270 = vmatpush1.msra.mxu0 0.0
  %271 = vmatprep.subr.mxu0 0.0
  %272 = vmatpush1.msra.mxu0 0.0
  %273 = vmatprep.subr.mxu0 0.0
  %274 = vmatpush1.msra.mxu0 0.0
  %275 = vmatprep.subr.mxu0 0.0
  %276 = vmatpush1.msra.mxu0 0.0
  %277 = vmatprep.subr.mxu0 0.0
  %278 = vmatpush1.msra.mxu0 0.0
  %279 = vmatprep.mubr.f32.mxu0 0.0
  %280 = vmatmul.mubr.f32.gmra.mrb[0].mxu0 %v213
  %v281 = vpop.f32.mrb[0].mxu0
  %v282 = vadd.f32 %v209, %v281
  %v283 = vpop.f32.mrb[0].mxu0
  %284 = vdwg.mxu0
  %285 = vst [vmem:[%s7] sm:$0xff] %v282
  // Predicated region
  $region30: #{deep_q_forward.1} parent=0 // pred_check
    _
  $region31: #{deep_q_forward.1} parent=0 // pred_check_branch
    %287 = sbr.rel (0) target = $region33
  $region32: #{deep_q_forward.1} parent=0 // pred_region
    _
  $region33: #{deep_q_forward.1} parent=0 // pred_fallthru
    _
  // Predicated region
  $region34: #{deep_q_forward.1} parent=0 // pred_check
    _
  $region35: #{deep_q_forward.1} parent=0 // pred_check_branch
    %289 = sbr.rel (0) target = $region37
  $region36: #{deep_q_forward.1} parent=0 // pred_region
    _
  $region37: #{deep_q_forward.1} parent=0 // pred_fallthru
    _

</llo_original>
